<compile_context>
chip_gen: v5e
topology: v5e:2x2
jax: 0.10.0
libtpu: 0.0.40
codegen_flags: <defaults>
</compile_context>

<pallas_src>
import functools

import jax
import jax.numpy as jnp
from jax.experimental import pallas as pl
from jax.experimental.pallas import tpu as pltpu

LANE = 128      # lane width (last dim)
SUBLANE = 8     # sublane width (second-to-last dim)


def _round_up(x, m):
    return (x + m - 1) // m * m


def _dnn_kernel(x_ref, w1_ref, b1_ref, wm_ref, bm_ref, we_ref, be_ref, o_ref,
                *, deep, compute_dtype):
    tile_b = x_ref.shape[0]
    width = wm_ref.shape[1]
    out_w = we_ref.shape[1]

    # Hoist bias broadcasts out of the depth loop (JAX does not CSE
    # broadcast_in_dim -- re-emitting it per layer wastes VPU/vreg bandwidth).
    b1 = jnp.broadcast_to(b1_ref[...], (tile_b, width))
    bm = jnp.broadcast_to(bm_ref[...], (tile_b, width))
    be = jnp.broadcast_to(be_ref[...], (tile_b, out_w))

    x = x_ref[...].astype(compute_dtype)

    # begLinear + ReLU
    h = jnp.dot(x, w1_ref[...], preferred_element_type=jnp.float32) + b1
    h = jnp.maximum(h, 0.0)

    # `deep` applications of the SHARED middleLinear + ReLU.
    # Fully unrolled: `deep` is a small compile-time constant, and unrolling
    # gives the scheduler a visible window across layers.
    wm = wm_ref[...]
    for _ in range(deep):
        h = jnp.dot(h.astype(compute_dtype), wm,
                    preferred_element_type=jnp.float32) + bm
        h = jnp.maximum(h, 0.0)

    # endLinear (no activation) -> lane-dense (padded) output store.
    o_ref[...] = (jnp.dot(h.astype(compute_dtype), we_ref[...],
                          preferred_element_type=jnp.float32) + be
                  ).astype(o_ref.dtype)


@functools.partial(jax.jit, static_argnames=("deep", "use_bf16"))
def _dnn_forward_jit(x2d, w_beg, b_beg, w_mid, b_mid, w_end, b_end,
                     *, deep, use_bf16):
    B, input_size = x2d.shape
    width = w_beg.shape[0]
    out_size = w_end.shape[0]

    compute_dtype = jnp.bfloat16 if use_bf16 else jnp.float32
    f32 = jnp.float32

    # ---- pad feature dims to lane multiples, batch tile to sublane multiple ----
    in_p = _round_up(input_size, LANE)
    w_p = _round_up(width, LANE)
    out_p = _round_up(out_size, LANE)

    tile_b = 128 if B >= 128 else _round_up(B, SUBLANE)
    b_pad = _round_up(B, tile_b)
    n_tiles = b_pad // tile_b

    # ---- weight prep (done once, inside jit -> folds into the graph) ----
    # PyTorch nn.Linear stores (out, in); transpose to (in, out) so the kernel
    # computes plain x @ W + b on the MXU.  Zero-pad to the padded shapes.
    def pad2(a, r, c):
        return jnp.pad(a, ((0, r - a.shape[0]), (0, c - a.shape[1])))

    w1_t = pad2(jnp.asarray(w_beg, f32).T, in_p, w_p).astype(compute_dtype)
    wm_t = pad2(jnp.asarray(w_mid, f32).T, w_p, w_p).astype(compute_dtype)
    we_t = pad2(jnp.asarray(w_end, f32).T, w_p, out_p).astype(compute_dtype)
    b1 = pad2(jnp.asarray(b_beg, f32).reshape(1, width), 1, w_p)
    bm = pad2(jnp.asarray(b_mid, f32).reshape(1, width), 1, w_p)
    be = pad2(jnp.asarray(b_end, f32).reshape(1, out_size), 1, out_p)

    x_pad = pad2(x2d.astype(f32), b_pad, in_p)

    # ---- VMEM budget (explicit; capped to v7x's 64 MiB physical VMEM) ----
    wbytes = compute_dtype.dtype.itemsize if hasattr(compute_dtype, "dtype") else jnp.dtype(compute_dtype).itemsize
    weight_bytes = (in_p * w_p + w_p * w_p + w_p * out_p) * wbytes \
        + (2 * w_p + out_p) * 4
    act_bytes = tile_b * (in_p + out_p) * 4           # double-buffered in/out tiles
    work_bytes = tile_b * w_p * 4 * 2                 # loop-carried activations
    vmem_bytes = int(min(64 << 20,
                         max(2 * (weight_bytes + 2 * act_bytes) + work_bytes
                             + (2 << 20), 8 << 20)))

    # ---- scheduler hint ----
    flops = 2 * b_pad * (in_p * w_p + deep * w_p * w_p + w_p * out_p)
    bytes_accessed = (b_pad * (in_p + out_p)) * 4 + weight_bytes
    cost = pl.CostEstimate(flops=flops, transcendentals=0,
                           bytes_accessed=bytes_accessed)

    kernel = functools.partial(_dnn_kernel, deep=deep,
                               compute_dtype=compute_dtype)

    # Activations tiled over the batch grid; weights/biases VMEM-resident.
    batch_spec = lambda cols: pl.BlockSpec((tile_b, cols), lambda i: (i, 0))
    resident = lambda shape: pl.BlockSpec(shape, lambda i: (0, 0))

    out_pad = pl.pallas_call(
        kernel,
        out_shape=jax.ShapeDtypeStruct((b_pad, out_p), f32),
        grid=(n_tiles,),
        in_specs=[
            batch_spec(in_p),                                   # x
            resident((in_p, w_p)), resident((1, w_p)),          # beg
            resident((w_p, w_p)),  resident((1, w_p)),          # mid (shared)
            resident((w_p, out_p)), resident((1, out_p)),       # end
        ],
        out_specs=batch_spec(out_p),
        compiler_params=pltpu.CompilerParams(
            dimension_semantics=("parallel",),
            vmem_limit_bytes=vmem_bytes),
        cost_estimate=cost,
    )(x_pad, w1_t, b1, wm_t, bm, we_t, be)

    # Slice away batch/feature padding (free layout plumbing in the wrapper).
    return out_pad[:B, :out_size]


def dnn_forward(x, params, *, input_size, deep, use_bf16=False):
    """x: any shape reshaped to (-1, input_size); returns (B, output_size)."""
    x2d = jnp.asarray(x, jnp.float32).reshape(-1, input_size)
    w_beg, b_beg, w_mid, b_mid, w_end, b_end = params
    return _dnn_forward_jit(x2d, w_beg, b_beg, w_mid, b_mid, w_end, b_end,
                            deep=deep, use_bf16=use_bf16)


def init_params(key, input_size, width, out_size):
    """Deterministic init mimicking nn.Linear's U(-1/sqrt(fan_in), +1/sqrt(fan_in))."""
    ks = jax.random.split(key, 6)

    def lin(kw, kb, fan_in, fan_out):
        bound = 1.0 / jnp.sqrt(fan_in)
        w = jax.random.uniform(kw, (fan_out, fan_in), jnp.float32, -bound, bound)
        b = jax.random.uniform(kb, (fan_out,), jnp.float32, -bound, bound)
        return w, b

    w_beg, b_beg = lin(ks[0], ks[1], input_size, width)
    w_mid, b_mid = lin(ks[2], ks[3], width, width)
    w_end, b_end = lin(ks[4], ks[5], width, out_size)
    return (w_beg, b_beg, w_mid, b_mid, w_end, b_end)


def dnn_reference(x, params, *, input_size, deep):
    """Pure-JAX reference matching the PyTorch forward (fp32)."""
    x = jnp.asarray(x, jnp.float32).reshape(-1, input_size)
    w_beg, b_beg, w_mid, b_mid, w_end, b_end = params
    h = jnp.maximum(x @ w_beg.T + b_beg, 0.0)
    for _ in range(deep):
        h = jnp.maximum(h @ w_mid.T + b_mid, 0.0)
    return h @ w_end.T + b_end


if __name__ == "__main__":
    # DNN(inputSize=16, width=32, deep=3, outputSize=8), batch of 2 samples.
    INPUT_SIZE, WIDTH, DEEP, OUTPUT_SIZE = 16, 32, 3, 8
    key = jax.random.PRNGKey(0)
    k_x, k_p = jax.random.split(key)

    x = jax.random.normal(k_x, (2, INPUT_SIZE), dtype=jnp.float32)
    params = init_params(k_p, INPUT_SIZE, WIDTH, OUTPUT_SIZE)

    ref = dnn_reference(x, params, input_size=INPUT_SIZE, deep=DEEP)

    # fp32 path: bitwise-friendly tolerance vs the fp32 reference.
    out = dnn_forward(x, params, input_size=INPUT_SIZE, deep=DEEP)
    out = jax.block_until_ready(out)
    assert out.shape == (2, OUTPUT_SIZE), out.shape
    assert jnp.allclose(out, ref, atol=1e-5, rtol=1e-5), (
        float(jnp.max(jnp.abs(out - ref))))

    # bf16-operand / fp32-accumulate path (the v6e/v7x MXU fast path): loose
    # tolerance vs the fp32 reference.
    out_bf16 = dnn_forward(x, params, input_size=INPUT_SIZE, deep=DEEP,
                           use_bf16=True)
    out_bf16 = jax.block_until_ready(out_bf16)
    assert out_bf16.shape == (2, OUTPUT_SIZE), out_bf16.shape
    assert float(jnp.max(jnp.abs(out_bf16 - ref))) < 0.25, (
        float(jnp.max(jnp.abs(out_bf16 - ref))))

    print("KERNEL_OK")
</pallas_src>

<mosaic_0001>
module attributes {stable_mosaic.version = 11 : i64} {
  func.func @_dnn_kernel(%arg0: i32, %arg1: memref<8x128xf32, #tpu.memory_space<vmem>>, %arg2: memref<128x128xf32, #tpu.memory_space<vmem>>, %arg3: memref<1x128xf32, #tpu.memory_space<vmem>>, %arg4: memref<128x128xf32, #tpu.memory_space<vmem>>, %arg5: memref<1x128xf32, #tpu.memory_space<vmem>>, %arg6: memref<128x128xf32, #tpu.memory_space<vmem>>, %arg7: memref<1x128xf32, #tpu.memory_space<vmem>>, %arg8: memref<8x128xf32, #tpu.memory_space<vmem>>) attributes {dimension_semantics = [#tpu.dimension_semantics<parallel>], iteration_bounds = array<i64: 1>, scalar_prefetch = 0 : i64, scratch_operands = 0 : i64, tpu.core_type = #tpu.core_type<tc>, window_params = [{transform_indices = @transform_0, window_bounds = array<i64: 8, 128>}, {pipeline_mode = #tpu.pipeline_mode<synchronous>, transform_indices = @transform_1, window_bounds = array<i64: 128, 128>}, {pipeline_mode = #tpu.pipeline_mode<synchronous>, transform_indices = @transform_2, window_bounds = array<i64: 1, 128>}, {pipeline_mode = #tpu.pipeline_mode<synchronous>, transform_indices = @transform_3, window_bounds = array<i64: 128, 128>}, {pipeline_mode = #tpu.pipeline_mode<synchronous>, transform_indices = @transform_4, window_bounds = array<i64: 1, 128>}, {pipeline_mode = #tpu.pipeline_mode<synchronous>, transform_indices = @transform_5, window_bounds = array<i64: 128, 128>}, {pipeline_mode = #tpu.pipeline_mode<synchronous>, transform_indices = @transform_6, window_bounds = array<i64: 1, 128>}, {transform_indices = @transform_7, window_bounds = array<i64: 8, 128>}]} {
    %c0 = arith.constant 0 : index
    %c0_0 = arith.constant 0 : index
    %0 = vector.load %arg3[%c0, %c0_0] : memref<1x128xf32, #tpu.memory_space<vmem>>, vector<1x128xf32>
    %1 = vector.shape_cast %0 : vector<1x128xf32> to vector<1x128xf32>
    %2 = vector.broadcast %1 : vector<1x128xf32> to vector<8x128xf32>
    %c0_1 = arith.constant 0 : index
    %c0_2 = arith.constant 0 : index
    %3 = vector.load %arg5[%c0_1, %c0_2] : memref<1x128xf32, #tpu.memory_space<vmem>>, vector<1x128xf32>
    %4 = vector.shape_cast %3 : vector<1x128xf32> to vector<1x128xf32>
    %5 = vector.broadcast %4 : vector<1x128xf32> to vector<8x128xf32>
    %c0_3 = arith.constant 0 : index
    %c0_4 = arith.constant 0 : index
    %6 = vector.load %arg7[%c0_3, %c0_4] : memref<1x128xf32, #tpu.memory_space<vmem>>, vector<1x128xf32>
    %7 = vector.shape_cast %6 : vector<1x128xf32> to vector<1x128xf32>
    %8 = vector.broadcast %7 : vector<1x128xf32> to vector<8x128xf32>
    %c0_5 = arith.constant 0 : index
    %c0_6 = arith.constant 0 : index
    %9 = vector.load %arg1[%c0_5, %c0_6] : memref<8x128xf32, #tpu.memory_space<vmem>>, vector<8x128xf32>
    %c0_7 = arith.constant 0 : index
    %c0_8 = arith.constant 0 : index
    %10 = vector.load %arg2[%c0_7, %c0_8] : memref<128x128xf32, #tpu.memory_space<vmem>>, vector<128x128xf32>
    %cst = arith.constant dense<0.000000e+00> : vector<8x128xf32>
    %11 = tpu.matmul %9, %10, %cst {dimension_numbers = #tpu.dot_dimension_numbers<[1], [0], [0], [1], [0, 0, 1, 1], [], []>} : vector<8x128xf32>, vector<128x128xf32>, vector<8x128xf32> -> vector<8x128xf32>
    %12 = arith.addf %11, %2 : vector<8x128xf32>
    %cst_9 = arith.constant 0.000000e+00 : f32
    %13 = vector.broadcast %cst_9 : f32 to vector<8x128xf32>
    %14 = arith.maximumf %12, %13 : vector<8x128xf32>
    %c0_10 = arith.constant 0 : index
    %c0_11 = arith.constant 0 : index
    %15 = vector.load %arg4[%c0_10, %c0_11] : memref<128x128xf32, #tpu.memory_space<vmem>>, vector<128x128xf32>
    %cst_12 = arith.constant dense<0.000000e+00> : vector<8x128xf32>
    %16 = tpu.matmul %14, %15, %cst_12 {dimension_numbers = #tpu.dot_dimension_numbers<[1], [0], [0], [1], [0, 0, 1, 1], [], []>} : vector<8x128xf32>, vector<128x128xf32>, vector<8x128xf32> -> vector<8x128xf32>
    %17 = arith.addf %16, %5 : vector<8x128xf32>
    %cst_13 = arith.constant 0.000000e+00 : f32
    %18 = vector.broadcast %cst_13 : f32 to vector<8x128xf32>
    %19 = arith.maximumf %17, %18 : vector<8x128xf32>
    %cst_14 = arith.constant dense<0.000000e+00> : vector<8x128xf32>
    %20 = tpu.matmul %19, %15, %cst_14 {dimension_numbers = #tpu.dot_dimension_numbers<[1], [0], [0], [1], [0, 0, 1, 1], [], []>} : vector<8x128xf32>, vector<128x128xf32>, vector<8x128xf32> -> vector<8x128xf32>
    %21 = arith.addf %20, %5 : vector<8x128xf32>
    %cst_15 = arith.constant 0.000000e+00 : f32
    %22 = vector.broadcast %cst_15 : f32 to vector<8x128xf32>
    %23 = arith.maximumf %21, %22 : vector<8x128xf32>
    %cst_16 = arith.constant dense<0.000000e+00> : vector<8x128xf32>
    %24 = tpu.matmul %23, %15, %cst_16 {dimension_numbers = #tpu.dot_dimension_numbers<[1], [0], [0], [1], [0, 0, 1, 1], [], []>} : vector<8x128xf32>, vector<128x128xf32>, vector<8x128xf32> -> vector<8x128xf32>
    %25 = arith.addf %24, %5 : vector<8x128xf32>
    %cst_17 = arith.constant 0.000000e+00 : f32
    %26 = vector.broadcast %cst_17 : f32 to vector<8x128xf32>
    %27 = arith.maximumf %25, %26 : vector<8x128xf32>
    %c0_18 = arith.constant 0 : index
    %c0_19 = arith.constant 0 : index
    %28 = vector.load %arg6[%c0_18, %c0_19] : memref<128x128xf32, #tpu.memory_space<vmem>>, vector<128x128xf32>
    %cst_20 = arith.constant dense<0.000000e+00> : vector<8x128xf32>
    %29 = tpu.matmul %27, %28, %cst_20 {dimension_numbers = #tpu.dot_dimension_numbers<[1], [0], [0], [1], [0, 0, 1, 1], [], []>} : vector<8x128xf32>, vector<128x128xf32>, vector<8x128xf32> -> vector<8x128xf32>
    %30 = arith.addf %29, %8 : vector<8x128xf32>
    %c0_21 = arith.constant 0 : index
    %c0_22 = arith.constant 0 : index
    %31 = vector.load %arg8[%c0_21, %c0_22] : memref<8x128xf32, #tpu.memory_space<vmem>>, vector<8x128xf32>
    tpu.vector_store %arg8[%c0_21, %c0_22], %30 {strides = array<i32>} : memref<8x128xf32, #tpu.memory_space<vmem>>, vector<8x128xf32>,
    return
  }
  func.func @transform_0(%arg0: i32) -> (i32, i32) {
    %c0_i32 = arith.constant 0 : i32
    %c0_i32_0 = arith.constant 0 : i32
    return %arg0, %c0_i32 : i32, i32
  }
  func.func @transform_1(%arg0: i32) -> (i32, i32) {
    %c0_i32 = arith.constant 0 : i32
    %c0_i32_0 = arith.constant 0 : i32
    %c0_i32_1 = arith.constant 0 : i32
    return %c0_i32, %c0_i32_0 : i32, i32
  }
  func.func @transform_2(%arg0: i32) -> (i32, i32) {
    %c0_i32 = arith.constant 0 : i32
    %c0_i32_0 = arith.constant 0 : i32
    %c0_i32_1 = arith.constant 0 : i32
    return %c0_i32, %c0_i32_0 : i32, i32
  }
  func.func @transform_3(%arg0: i32) -> (i32, i32) {
    %c0_i32 = arith.constant 0 : i32
    %c0_i32_0 = arith.constant 0 : i32
    %c0_i32_1 = arith.constant 0 : i32
    return %c0_i32, %c0_i32_0 : i32, i32
  }
  func.func @transform_4(%arg0: i32) -> (i32, i32) {
    %c0_i32 = arith.constant 0 : i32
    %c0_i32_0 = arith.constant 0 : i32
    %c0_i32_1 = arith.constant 0 : i32
    return %c0_i32, %c0_i32_0 : i32, i32
  }
  func.func @transform_5(%arg0: i32) -> (i32, i32) {
    %c0_i32 = arith.constant 0 : i32
    %c0_i32_0 = arith.constant 0 : i32
    %c0_i32_1 = arith.constant 0 : i32
    return %c0_i32, %c0_i32_0 : i32, i32
  }
  func.func @transform_6(%arg0: i32) -> (i32, i32) {
    %c0_i32 = arith.constant 0 : i32
    %c0_i32_0 = arith.constant 0 : i32
    %c0_i32_1 = arith.constant 0 : i32
    return %c0_i32, %c0_i32_0 : i32, i32
  }
  func.func @transform_7(%arg0: i32) -> (i32, i32) {
    %c0_i32 = arith.constant 0 : i32
    %c0_i32_0 = arith.constant 0 : i32
    return %arg0, %c0_i32 : i32, i32
  }
}

</mosaic_0001>

<llo_original>
// kernel: _dnn_forward_jit.1
$region0: #{_dnn_forward_jit.1}
  #allocation0 [shape = 'u32[]', space=smem, size = 0x4, offset = 0x4, fixed_abs, tag = 'smem constant byte address 0x4 - core index']
  #allocation1 [shape = 'u32[72,128]{1,0:T(1,128)}', space=vmem, size = 0x9000, scoped, tag = 'internal scratch']
  %s0 = inlined_call_operand.vmem [shape: f32[8,128], index: 0, kind: input, shape index: {}]
  %s1 = inlined_call_operand.vmem [shape: f32[128,128], index: 1, kind: input, shape index: {}]
  %s2 = inlined_call_operand.vmem [shape: f32[1,128], index: 2, kind: input, shape index: {}]
  %s3 = inlined_call_operand.vmem [shape: f32[128,128], index: 3, kind: input, shape index: {}]
  %s4 = inlined_call_operand.vmem [shape: f32[1,128], index: 4, kind: input, shape index: {}]
  %s5 = inlined_call_operand.vmem [shape: f32[128,128], index: 5, kind: input, shape index: {}]
  %s6 = inlined_call_operand.vmem [shape: f32[1,128], index: 6, kind: input, shape index: {}]
  %s7 = inlined_call_operand.vmem [shape: f32[8,128], index: 7, kind: output, shape index: {}]
  %s8 = sld [smem:[#allocation0]]
  $region38: #{_dnn_forward_jit.1} parent=0
    _
  %s10 = ssub.s32 1, %s8
  %s11 = scalar_select 0, %s10, %s8
  // Predicated region
  $region2: #{_dnn_forward_jit.1} parent=0 // pred_check
    _
  $region3: #{_dnn_forward_jit.1} parent=0 // pred_check_branch
    %13 = sbr.rel (0) target = $region5
  $region4: #{_dnn_forward_jit.1} parent=0 // pred_region
    _
  $region5: #{_dnn_forward_jit.1} parent=0 // pred_fallthru
    _
  // Predicated region
  $region6: #{_dnn_forward_jit.1} parent=0 // pred_check
    _
  $region7: #{_dnn_forward_jit.1} parent=0 // pred_check_branch
    %15 = sbr.rel (0) target = $region9
  $region8: #{_dnn_forward_jit.1} parent=0 // pred_region
    _
  $region9: #{_dnn_forward_jit.1} parent=0 // pred_fallthru
    _
  // Predicated region
  $region10: #{_dnn_forward_jit.1} parent=0 // pred_check
    _
  $region11: #{_dnn_forward_jit.1} parent=0 // pred_check_branch
    %17 = sbr.rel (0) target = $region13
  $region12: #{_dnn_forward_jit.1} parent=0 // pred_region
    _
  $region13: #{_dnn_forward_jit.1} parent=0 // pred_fallthru
    _
  // Predicated region
  $region14: #{_dnn_forward_jit.1} parent=0 // pred_check
    _
  $region15: #{_dnn_forward_jit.1} parent=0 // pred_check_branch
    %19 = sbr.rel (0) target = $region17
  $region16: #{_dnn_forward_jit.1} parent=0 // pred_region
    _
  $region17: #{_dnn_forward_jit.1} parent=0 // pred_fallthru
    _
  // Predicated region
  $region18: #{_dnn_forward_jit.1} parent=0 // pred_check
    _
  $region19: #{_dnn_forward_jit.1} parent=0 // pred_check_branch
    %21 = sbr.rel (0) target = $region21
  $region20: #{_dnn_forward_jit.1} parent=0 // pred_region
    _
  $region21: #{_dnn_forward_jit.1} parent=0 // pred_fallthru
    _
  // Predicated region
  $region22: #{_dnn_forward_jit.1} parent=0 // pred_check
    _
  $region23: #{_dnn_forward_jit.1} parent=0 // pred_check_branch
    %23 = sbr.rel (0) target = $region25
  $region24: #{_dnn_forward_jit.1} parent=0 // pred_region
    _
  $region25: #{_dnn_forward_jit.1} parent=0 // pred_fallthru
    _
  // Predicated region
  $region26: #{_dnn_forward_jit.1} parent=0 // pred_check
    _
  $region27: #{_dnn_forward_jit.1} parent=0 // pred_check_branch
    %25 = sbr.rel (0) target = $region29
  $region28: #{_dnn_forward_jit.1} parent=0 // pred_region
    _
  $region29: #{_dnn_forward_jit.1} parent=0 // pred_fallthru
    _
  %v26 = vld [vmem:[%s2] sm:$0x1]
  %v28 = vperm.slane %v26, 0
  %v30 = vld [vmem:[%s4] sm:$0x1]
  %v32 = vperm.slane %v30, 0
  %v34 = vld [vmem:[%s6] sm:$0x1]
  %v36 = vperm.slane %v34, 0
  %v38 = vld [vmem:[%s0] sm:$0xff]
  %v39 = vld [vmem:[%s1] sm:$0xff]
  %v40 = vld [vmem:[%s1 + $0x8] sm:$0xff]
  %v41 = vld [vmem:[%s1 + $0x10] sm:$0xff]
  %v42 = vld [vmem:[%s1 + $0x18] sm:$0xff]
  %v43 = vld [vmem:[%s1 + $0x20] sm:$0xff]
  %v44 = vld [vmem:[%s1 + $0x28] sm:$0xff]
  %v45 = vld [vmem:[%s1 + $0x30] sm:$0xff]
  %v46 = vld [vmem:[%s1 + $0x38] sm:$0xff]
  %v47 = vld [vmem:[%s1 + $0x40] sm:$0xff]
  %v48 = vld [vmem:[%s1 + $0x48] sm:$0xff]
  %v49 = vld [vmem:[%s1 + $0x50] sm:$0xff]
  %v50 = vld [vmem:[%s1 + $0x58] sm:$0xff]
  %v51 = vld [vmem:[%s1 + $0x60] sm:$0xff]
  %v52 = vld [vmem:[%s1 + $0x68] sm:$0xff]
  %v53 = vld [vmem:[%s1 + $0x70] sm:$0xff]
  %v54 = vld [vmem:[%s1 + $0x78] sm:$0xff]
  %55 = vmatpush.msra.mxu0 %v54
  %56 = vmatpush.msra.mxu0 %v53
  %57 = vmatpush.msra.mxu0 %v52
  %58 = vmatpush.msra.mxu0 %v51
  %59 = vmatpush.msra.mxu0 %v50
  %60 = vmatpush.msra.mxu0 %v49
  %61 = vmatpush.msra.mxu0 %v48
  %62 = vmatpush.msra.mxu0 %v47
  %63 = vmatpush.msra.mxu0 %v46
  %64 = vmatpush.msra.mxu0 %v45
  %65 = vmatpush.msra.mxu0 %v44
  %66 = vmatpush.msra.mxu0 %v43
  %67 = vmatpush.msra.mxu0 %v42
  %68 = vmatpush.msra.mxu0 %v41
  %69 = vmatpush.msra.mxu0 %v40
  %70 = vmatpush.msra.mxu0 %v39
  %71 = vmatmul.f32.gmra.mxu0 %v38
  %v72 = vpop.f32.mrf.mxu0
  %v73 = vadd.f32 %v28, %v72
  %74 = vdwg.mxu0
  %v75 = vmax.f32 %v73, 0.0
  %v76 = vld [vmem:[%s3] sm:$0xff]
  %v77 = vld [vmem:[%s3 + $0x8] sm:$0xff]
  %v78 = vld [vmem:[%s3 + $0x10] sm:$0xff]
  %v79 = vld [vmem:[%s3 + $0x18] sm:$0xff]
  %v80 = vld [vmem:[%s3 + $0x20] sm:$0xff]
  %v81 = vld [vmem:[%s3 + $0x28] sm:$0xff]
  %v82 = vld [vmem:[%s3 + $0x30] sm:$0xff]
  %v83 = vld [vmem:[%s3 + $0x38] sm:$0xff]
  %v84 = vld [vmem:[%s3 + $0x40] sm:$0xff]
  %v85 = vld [vmem:[%s3 + $0x48] sm:$0xff]
  %v86 = vld [vmem:[%s3 + $0x50] sm:$0xff]
  %v87 = vld [vmem:[%s3 + $0x58] sm:$0xff]
  %v88 = vld [vmem:[%s3 + $0x60] sm:$0xff]
  %v89 = vld [vmem:[%s3 + $0x68] sm:$0xff]
  %v90 = vld [vmem:[%s3 + $0x70] sm:$0xff]
  %v91 = vld [vmem:[%s3 + $0x78] sm:$0xff]
  %92 = vmatpush.msra.mxu0 %v91
  %93 = vmatpush.msra.mxu0 %v90
  %94 = vmatpush.msra.mxu0 %v89
  %95 = vmatpush.msra.mxu0 %v88
  %96 = vmatpush.msra.mxu0 %v87
  %97 = vmatpush.msra.mxu0 %v86
  %98 = vmatpush.msra.mxu0 %v85
  %99 = vmatpush.msra.mxu0 %v84
  %100 = vmatpush.msra.mxu0 %v83
  %101 = vmatpush.msra.mxu0 %v82
  %102 = vmatpush.msra.mxu0 %v81
  %103 = vmatpush.msra.mxu0 %v80
  %104 = vmatpush.msra.mxu0 %v79
  %105 = vmatpush.msra.mxu0 %v78
  %106 = vmatpush.msra.mxu0 %v77
  %107 = vmatpush.msra.mxu0 %v76
  %108 = vmatmul.f32.gmra.mxu0 %v75
  %v109 = vpop.f32.mrf.mxu0
  %v110 = vadd.f32 %v32, %v109
  %111 = vdwg.mxu0
  %v112 = vmax.f32 %v110, 0.0
  %113 = vmatpush.msra.mxu0 %v91
  %114 = vmatpush.msra.mxu0 %v90
  %115 = vmatpush.msra.mxu0 %v89
  %116 = vmatpush.msra.mxu0 %v88
  %117 = vmatpush.msra.mxu0 %v87
  %118 = vmatpush.msra.mxu0 %v86
  %119 = vmatpush.msra.mxu0 %v85
  %120 = vmatpush.msra.mxu0 %v84
  %121 = vmatpush.msra.mxu0 %v83
  %122 = vmatpush.msra.mxu0 %v82
  %123 = vmatpush.msra.mxu0 %v81
  %124 = vmatpush.msra.mxu0 %v80
  %125 = vmatpush.msra.mxu0 %v79
  %126 = vmatpush.msra.mxu0 %v78
  %127 = vmatpush.msra.mxu0 %v77
  %128 = vmatpush.msra.mxu0 %v76
  %129 = vmatmul.f32.gmra.mxu0 %v112
  %v130 = vpop.f32.mrf.mxu0
  %v131 = vadd.f32 %v32, %v130
  %132 = vdwg.mxu0
  %v133 = vmax.f32 %v131, 0.0
  %134 = vmatpush.msra.mxu0 %v91
  %135 = vmatpush.msra.mxu0 %v90
  %136 = vmatpush.msra.mxu0 %v89
  %137 = vmatpush.msra.mxu0 %v88
  %138 = vmatpush.msra.mxu0 %v87
  %139 = vmatpush.msra.mxu0 %v86
  %140 = vmatpush.msra.mxu0 %v85
  %141 = vmatpush.msra.mxu0 %v84
  %142 = vmatpush.msra.mxu0 %v83
  %143 = vmatpush.msra.mxu0 %v82
  %144 = vmatpush.msra.mxu0 %v81
  %145 = vmatpush.msra.mxu0 %v80
  %146 = vmatpush.msra.mxu0 %v79
  %147 = vmatpush.msra.mxu0 %v78
  %148 = vmatpush.msra.mxu0 %v77
  %149 = vmatpush.msra.mxu0 %v76
  %150 = vmatmul.f32.gmra.mxu0 %v133
  %v151 = vpop.f32.mrf.mxu0
  %v152 = vadd.f32 %v32, %v151
  %153 = vdwg.mxu0
  %v154 = vmax.f32 %v152, 0.0
  %v155 = vld [vmem:[%s5] sm:$0xff]
  %v156 = vld [vmem:[%s5 + $0x8] sm:$0xff]
  %v157 = vld [vmem:[%s5 + $0x10] sm:$0xff]
  %v158 = vld [vmem:[%s5 + $0x18] sm:$0xff]
  %v159 = vld [vmem:[%s5 + $0x20] sm:$0xff]
  %v160 = vld [vmem:[%s5 + $0x28] sm:$0xff]
  %v161 = vld [vmem:[%s5 + $0x30] sm:$0xff]
  %v162 = vld [vmem:[%s5 + $0x38] sm:$0xff]
  %v163 = vld [vmem:[%s5 + $0x40] sm:$0xff]
  %v164 = vld [vmem:[%s5 + $0x48] sm:$0xff]
  %v165 = vld [vmem:[%s5 + $0x50] sm:$0xff]
  %v166 = vld [vmem:[%s5 + $0x58] sm:$0xff]
  %v167 = vld [vmem:[%s5 + $0x60] sm:$0xff]
  %v168 = vld [vmem:[%s5 + $0x68] sm:$0xff]
  %v169 = vld [vmem:[%s5 + $0x70] sm:$0xff]
  %v170 = vld [vmem:[%s5 + $0x78] sm:$0xff]
  %171 = vmatpush.msra.mxu0 %v170
  %172 = vmatpush.msra.mxu0 %v169
  %173 = vmatpush.msra.mxu0 %v168
  %174 = vmatpush.msra.mxu0 %v167
  %175 = vmatpush.msra.mxu0 %v166
  %176 = vmatpush.msra.mxu0 %v165
  %177 = vmatpush.msra.mxu0 %v164
  %178 = vmatpush.msra.mxu0 %v163
  %179 = vmatpush.msra.mxu0 %v162
  %180 = vmatpush.msra.mxu0 %v161
  %181 = vmatpush.msra.mxu0 %v160
  %182 = vmatpush.msra.mxu0 %v159
  %183 = vmatpush.msra.mxu0 %v158
  %184 = vmatpush.msra.mxu0 %v157
  %185 = vmatpush.msra.mxu0 %v156
  %186 = vmatpush.msra.mxu0 %v155
  %187 = vmatmul.f32.gmra.mxu0 %v154
  %v188 = vpop.f32.mrf.mxu0
  %v189 = vadd.f32 %v36, %v188
  %190 = vdwg.mxu0
  %191 = vst [vmem:[%s7] sm:$0xff] %v189
  // Predicated region
  $region30: #{_dnn_forward_jit.1} parent=0 // pred_check
    _
  $region31: #{_dnn_forward_jit.1} parent=0 // pred_check_branch
    %193 = sbr.rel (0) target = $region33
  $region32: #{_dnn_forward_jit.1} parent=0 // pred_region
    _
  $region33: #{_dnn_forward_jit.1} parent=0 // pred_fallthru
    _
  // Predicated region
  $region34: #{_dnn_forward_jit.1} parent=0 // pred_check
    _
  $region35: #{_dnn_forward_jit.1} parent=0 // pred_check_branch
    %195 = sbr.rel (0) target = $region37
  $region36: #{_dnn_forward_jit.1} parent=0 // pred_region
    _
  $region37: #{_dnn_forward_jit.1} parent=0 // pred_fallthru
    _

</llo_original>
